<compile_context>
chip_gen: v7x
topology: tpu7x:2x2x1
jax: 0.10.0
libtpu: 0.0.40
codegen_flags: <defaults>
</compile_context>

<pallas_src>
import jax
import jax.numpy as jnp
from jax import lax
from jax.experimental import pallas as pl
from jax.experimental.pallas import tpu as pltpu

_SQRT_HALF = 0.7071067811865476


def _erf(z):
    # Abramowitz & Stegun 7.1.26 polynomial erf (|abs err| <= 1.5e-7).
    a = jnp.abs(z)
    den = 1.0 + 0.3275911 * a
    # EUP approx reciprocal + one Newton step: keeps the divide off the VALU
    # while staying at ~1e-7 relative error (well inside the 1e-3 tolerance).
    r = pl.reciprocal(den, approx=True)
    t = r * (2.0 - den * r)
    poly = t * (0.254829592 + t * (-0.284496736 + t * (1.421413741
               + t * (-1.453152027 + t * 1.061405429))))
    e = 1.0 - poly * jnp.exp(-a * a)
    return jnp.where(z < 0, -e, e)


def _gelu(x):
    # exact (erf-based) GELU, matching torch.nn.GELU(approximate='none')
    return 0.5 * x * (1.0 + _erf(x * _SQRT_HALF))


# ----------------------------- K1 / K3 kernels --------------------------------

def _k1_kernel(x_ref, xd_ref, w_ref, b_ref, sig_ref, o_ref):
    """proj_1 (1x1 conv) + ElementScale residual vs hoisted pool term + GELU."""
    x = x_ref[0]                                                   # (C, T)
    y = jnp.dot(w_ref[...], x, preferred_element_type=jnp.float32) + b_ref[...]
    y = y + sig_ref[...] * (y - xd_ref[0])                         # x + sigma*(x - x_d)
    o_ref[0] = _gelu(y)


def _k3_kernel(mfr_ref, x1_ref, w_ref, b_ref, o_ref):
    """aggr (1x1 conv) + GELU + gating multiply with the stage-1 activation."""
    y = jnp.dot(w_ref[...], mfr_ref[0],
                preferred_element_type=jnp.float32) + b_ref[...]
    o_ref[0] = _gelu(y) * x1_ref[0]


# -------------------------------- K2 kernel -----------------------------------

def _wmax_butterfly(cur, xp_ref, idx, d, D, H, W, axis):
    """Aligned window-max of (power-of-two) size d along `axis` (1=rows,
    2=cols), broadcast back to full resolution.  XOR butterfly: the partner at
    index i^s is read back from the zero-padded scratch with static shifted
    slices (no rolls, no lane reshapes, no concats)."""
    s = 1
    while s < d:
        xp_ref[:, D:D + H, D:D + W] = cur
        if axis == 1:
            fwd = xp_ref[:, D + s:D + s + H, D:D + W]
            bwd = xp_ref[:, D - s:D - s + H, D:D + W]
        else:
            fwd = xp_ref[:, D:D + H, D + s:D + s + W]
            bwd = xp_ref[:, D:D + H, D - s:D - s + W]
        partner = jnp.where((idx & s) == 0, fwd, bwd)              # value at i ^ s
        cur = jnp.maximum(cur, partner)
        s *= 2
    return cur


def _make_k2_kernel(n_levels, cd, H, W, D):
    def k2_kernel(x_ref, w_ref, b_ref, o_ref, xp_ref):
        # x_ref : (cd, H, W)           one level's stage-1 activation channels
        # w_ref : SMEM (n_levels*9*cd,) depthwise weights, idx=((l*3+ky)*3+kx)*cd+c
        # b_ref : SMEM (n_levels*cd,)   depthwise biases,  idx=l*cd+c
        # o_ref : (cd, H, W)
        # xp_ref: (cd, H+2D, W+2D)      zero-padded scratch
        lvl_id = pl.program_id(1)
        cur0 = x_ref[...]
        row_id = lax.broadcasted_iota(jnp.int32, (cd, H, W), 1)
        col_id = lax.broadcasted_iota(jnp.int32, (cd, H, W), 2)

        for lvl in range(n_levels):
            d = 1 if lvl == 0 else 2 ** (lvl + 1)   # pool window / tap dilation

            @pl.when(lvl_id == lvl)
            def _(lvl=lvl, d=d):
                # zero only the d-wide border band the taps will read
                zrow = jnp.zeros((cd, d, W + 2 * D), jnp.float32)
                zcol = jnp.zeros((cd, H, d), jnp.float32)
                xp_ref[:, D - d:D, :] = zrow
                xp_ref[:, D + H:D + H + d, :] = zrow
                xp_ref[:, D:D + H, D - d:D] = zcol
                xp_ref[:, D:D + H, D + W:D + W + d] = zcol

                cur = cur0
                if d > 1:
                    # adaptive_max_pool2d to (H/d, W/d), kept at full resolution
                    cur = _wmax_butterfly(cur, xp_ref, row_id, d, D, H, W, axis=1)
                    cur = _wmax_butterfly(cur, xp_ref, col_id, d, D, H, W, axis=2)
                xp_ref[:, D:D + H, D:D + W] = cur

                # depthwise 3x3 at pooled resolution + nearest upsample ==
                # 9 d-dilated taps of the padded, pooled-expanded buffer.
                for c in range(cd):
                    acc = jnp.zeros((H, W), jnp.float32) + b_ref[lvl * cd + c]
                    for ky in range(3):
                        r0 = D + (ky - 1) * d
                        for kx in range(3):
                            c0 = D + (kx - 1) * d
                            wt = w_ref[(lvl * 9 + ky * 3 + kx) * cd + c]
                            acc = acc + wt * xp_ref[c, r0:r0 + H, c0:c0 + W]
                    o_ref[c] = acc
    return k2_kernel


# -------------------------------- wrapper -------------------------------------

def _choose_spatial_tile(hw, target=2048):
    """Largest lane-dense tile of the flattened spatial axis (multiple of 128
    dividing HW, or the full axis)."""
    if hw <= target:
        return hw
    t = (target // 128) * 128
    while t >= 128:
        if hw % t == 0:
            return t
        t -= 128
    return hw


def _vmem_limit(per_step_bytes):
    # headroom over the double-buffered working set; stays below v7x physical.
    return int(min(60 * 1024 * 1024, max(24 * 1024 * 1024, 2 * per_step_bytes)))


def safm7_forward(x, params):
    """x: (N, C, H, W) float32 (NCHW, like the PyTorch module)."""
    w1, b1, sigma, dww, dwb, wa, ba = params
    N, C, H, W = x.shape
    L = dww.shape[0]
    cd = C // L
    HW = H * W
    assert C % L == 0 and H % (2 ** L) == 0 and W % (2 ** L) == 0

    T = _choose_spatial_tile(HW)
    nt = HW // T

    # hoisted global-avg-pool term: x_d = w1 @ mean_hw(x) + b1   (tiny, (N, C))
    x_flat = x.reshape(N, C, HW)
    x_mean = jnp.mean(x_flat, axis=2)
    xd = jnp.einsum('oi,ni->no', w1, x_mean,
                    precision=lax.Precision.HIGHEST) + b1[None, :]

    # ---- K1: proj_1 + ElementScale residual + GELU on (C, T) tiles ----
    k1_bytes = 2 * (2 * C * T * 4) + C * C * 4
    x1_flat = pl.pallas_call(
        _k1_kernel,
        out_shape=jax.ShapeDtypeStruct((N, C, HW), jnp.float32),
        grid=(N, nt),
        in_specs=[
            pl.BlockSpec((1, C, T), lambda n, t: (n, 0, t)),
            pl.BlockSpec((1, C, 1), lambda n, t: (n, 0, 0)),
            pl.BlockSpec((C, C), lambda n, t: (0, 0)),
            pl.BlockSpec((C, 1), lambda n, t: (0, 0)),
            pl.BlockSpec((C, 1), lambda n, t: (0, 0)),
        ],
        out_specs=pl.BlockSpec((1, C, T), lambda n, t: (n, 0, t)),
        compiler_params=pltpu.CompilerParams(
            dimension_semantics=("parallel", "parallel"),
            vmem_limit_bytes=_vmem_limit(k1_bytes)),
    )(x_flat, xd[:, :, None], w1, b1[:, None], sigma[:, None])

    # ---- K2: per-(batch, level) max-pool + depthwise 3x3 + nearest upsample ----
    D = 2 ** L if L > 1 else 1
    x1_lvl = x1_flat.reshape(N, L, cd, H, W)          # pure reshape, no transpose
    dww_s = dww.reshape(-1)                           # (L*9*cd,)
    dwb_s = dwb.reshape(-1)                           # (L*cd,)
    k2_bytes = 2 * (2 * cd * H * W * 4) + cd * (H + 2 * D) * (W + 2 * D) * 4
    mfr_lvl = pl.pallas_call(
        _make_k2_kernel(L, cd, H, W, D),
        out_shape=jax.ShapeDtypeStruct((N, L, cd, H, W), jnp.float32),
        grid=(N, L),
        in_specs=[
            pl.BlockSpec((None, None, cd, H, W), lambda n, i: (n, i, 0, 0, 0)),
            pl.BlockSpec(memory_space=pltpu.MemorySpace.SMEM),
            pl.BlockSpec(memory_space=pltpu.MemorySpace.SMEM),
        ],
        out_specs=pl.BlockSpec((None, None, cd, H, W), lambda n, i: (n, i, 0, 0, 0)),
        scratch_shapes=[pltpu.VMEM((cd, H + 2 * D, W + 2 * D), jnp.float32)],
        compiler_params=pltpu.CompilerParams(
            dimension_semantics=("parallel", "parallel"),
            vmem_limit_bytes=_vmem_limit(k2_bytes)),
    )(x1_lvl, dww_s, dwb_s)

    # ---- K3: aggr + GELU, gated by the stage-1 activation, on (C, T) tiles ----
    mfr_flat = mfr_lvl.reshape(N, C, HW)              # pure reshape, no transpose
    k3_bytes = 2 * (3 * C * T * 4) + C * C * 4
    out_flat = pl.pallas_call(
        _k3_kernel,
        out_shape=jax.ShapeDtypeStruct((N, C, HW), jnp.float32),
        grid=(N, nt),
        in_specs=[
            pl.BlockSpec((1, C, T), lambda n, t: (n, 0, t)),
            pl.BlockSpec((1, C, T), lambda n, t: (n, 0, t)),
            pl.BlockSpec((C, C), lambda n, t: (0, 0)),
            pl.BlockSpec((C, 1), lambda n, t: (0, 0)),
        ],
        out_specs=pl.BlockSpec((1, C, T), lambda n, t: (n, 0, t)),
        compiler_params=pltpu.CompilerParams(
            dimension_semantics=("parallel", "parallel"),
            vmem_limit_bytes=_vmem_limit(k3_bytes)),
    )(mfr_flat, x1_flat, wa, ba[:, None])

    return out_flat.reshape(N, C, H, W)


# --------------------------- pure-JAX reference -------------------------------

def reference_forward(x, params):
    """Pure-JAX (non-Pallas) reference mirroring the PyTorch forward."""
    w1, b1, sigma, dww, dwb, wa, ba = params
    N, C, H, W = x.shape
    L = dww.shape[0]
    cd = C // L
    hp = lax.Precision.HIGHEST

    y = jnp.einsum('oi,nihw->nohw', w1, x, precision=hp) + b1[None, :, None, None]
    x_d = jnp.mean(y, axis=(2, 3), keepdims=True)
    y = y + sigma[None, :, None, None] * (y - x_d)
    y = jax.nn.gelu(y, approximate=False)

    outs = []
    for i in range(L):
        xc = y[:, i * cd:(i + 1) * cd]
        if i == 0:
            s = xc
        else:
            k = 2 ** (i + 1)
            s = xc.reshape(N, cd, H // k, k, W // k, k).max(axis=(3, 5))
        wconv = jnp.transpose(dww[i], (2, 0, 1))[:, None, :, :]    # (cd, 1, 3, 3)
        s = lax.conv_general_dilated(
            s, wconv, window_strides=(1, 1), padding=((1, 1), (1, 1)),
            dimension_numbers=('NCHW', 'OIHW', 'NCHW'),
            feature_group_count=cd, precision=hp)
        s = s + dwb[i][None, :, None, None]
        if i > 0:
            k = 2 ** (i + 1)
            s = jnp.repeat(jnp.repeat(s, k, axis=2), k, axis=3)
        outs.append(s)
    cat = jnp.concatenate(outs, axis=1)
    o = jnp.einsum('oi,nihw->nohw', wa, cat, precision=hp) + ba[None, :, None, None]
    return jax.nn.gelu(o, approximate=False) * y


if __name__ == "__main__":
    N, dim, H, W = 2, 8, 16, 16
    n_levels = 4
    cd = dim // n_levels

    key = jax.random.PRNGKey(0)
    ks = jax.random.split(key, 7)
    w1 = (0.3 * jax.random.normal(ks[0], (dim, dim))).astype(jnp.float32)
    b1 = (0.1 * jax.random.normal(ks[1], (dim,))).astype(jnp.float32)
    sigma = jnp.full((dim,), 1e-5, dtype=jnp.float32)     # ElementScale init_value
    dww = (0.3 * jax.random.normal(ks[2], (n_levels, 3, 3, cd))).astype(jnp.float32)
    dwb = (0.1 * jax.random.normal(ks[3], (n_levels, cd))).astype(jnp.float32)
    wa = (0.3 * jax.random.normal(ks[4], (dim, dim))).astype(jnp.float32)
    ba = (0.1 * jax.random.normal(ks[5], (dim,))).astype(jnp.float32)
    params = (w1, b1, sigma, dww, dwb, wa, ba)

    x = jax.random.normal(ks[6], (N, dim, H, W), dtype=jnp.float32)

    out = safm7_forward(x, params)
    out = jax.block_until_ready(out)

    ref = reference_forward(x, params)
    err = float(jnp.max(jnp.abs(out - ref)))
    if not (out.shape == ref.shape and err < 1e-3):
        raise AssertionError(f"Pallas SAFM7 mismatch vs reference: max|err|={err}")
    print("KERNEL_OK")
</pallas_src>

<mosaic_0001>
module attributes {stable_mosaic.version = 11 : i64} {
  func.func @_k1_kernel(%arg0: i32, %arg1: i32, %arg2: memref<1x8x256xf32, #tpu.memory_space<vmem>>, %arg3: memref<1x8x1xf32, #tpu.memory_space<vmem>>, %arg4: memref<8x8xf32, #tpu.memory_space<vmem>>, %arg5: memref<8x1xf32, #tpu.memory_space<vmem>>, %arg6: memref<8x1xf32, #tpu.memory_space<vmem>>, %arg7: memref<1x8x256xf32, #tpu.memory_space<vmem>>) attributes {dimension_semantics = [#tpu.dimension_semantics<parallel>, #tpu.dimension_semantics<parallel>], iteration_bounds = array<i64: 2, 1>, scalar_prefetch = 0 : i64, scratch_operands = 0 : i64, tpu.core_type = #tpu.core_type<tc>, window_params = [{transform_indices = @transform_0, window_bounds = array<i64: 1, 8, 256>}, {transform_indices = @transform_1, window_bounds = array<i64: 1, 8, 1>}, {pipeline_mode = #tpu.pipeline_mode<synchronous>, transform_indices = @transform_2, window_bounds = array<i64: 8, 8>}, {pipeline_mode = #tpu.pipeline_mode<synchronous>, transform_indices = @transform_3, window_bounds = array<i64: 8, 1>}, {pipeline_mode = #tpu.pipeline_mode<synchronous>, transform_indices = @transform_4, window_bounds = array<i64: 8, 1>}, {transform_indices = @transform_5, window_bounds = array<i64: 1, 8, 256>}]} {
    %c0 = arith.constant 0 : index
    %c0_0 = arith.constant 0 : index
    %c0_1 = arith.constant 0 : index
    %0 = vector.load %arg2[%c0, %c0_0, %c0_1] : memref<1x8x256xf32, #tpu.memory_space<vmem>>, vector<1x8x256xf32>
    %1 = vector.shape_cast %0 : vector<1x8x256xf32> to vector<8x256xf32>
    %c0_2 = arith.constant 0 : index
    %c0_3 = arith.constant 0 : index
    %2 = vector.load %arg4[%c0_2, %c0_3] : memref<8x8xf32, #tpu.memory_space<vmem>>, vector<8x8xf32>
    %cst = arith.constant dense<0.000000e+00> : vector<8x256xf32>
    %3 = tpu.matmul %2, %1, %cst {dimension_numbers = #tpu.dot_dimension_numbers<[1], [0], [0], [1], [0, 0, 1, 1], [], []>} : vector<8x8xf32>, vector<8x256xf32>, vector<8x256xf32> -> vector<8x256xf32>
    %c0_4 = arith.constant 0 : index
    %c0_5 = arith.constant 0 : index
    %4 = vector.load %arg5[%c0_4, %c0_5] : memref<8x1xf32, #tpu.memory_space<vmem>>, vector<8x1xf32>
    %5 = vector.broadcast %4 : vector<8x1xf32> to vector<8x256xf32>
    %6 = arith.addf %3, %5 : vector<8x256xf32>
    %c0_6 = arith.constant 0 : index
    %c0_7 = arith.constant 0 : index
    %7 = vector.load %arg6[%c0_6, %c0_7] : memref<8x1xf32, #tpu.memory_space<vmem>>, vector<8x1xf32>
    %c0_8 = arith.constant 0 : index
    %c0_9 = arith.constant 0 : index
    %c0_10 = arith.constant 0 : index
    %8 = vector.load %arg3[%c0_8, %c0_9, %c0_10] : memref<1x8x1xf32, #tpu.memory_space<vmem>>, vector<1x8x1xf32>
    %9 = vector.shape_cast %8 : vector<1x8x1xf32> to vector<8x1xf32>
    %10 = vector.broadcast %9 : vector<8x1xf32> to vector<8x256xf32>
    %11 = arith.subf %6, %10 : vector<8x256xf32>
    %12 = vector.broadcast %7 : vector<8x1xf32> to vector<8x256xf32>
    %13 = arith.mulf %12, %11 : vector<8x256xf32>
    %14 = arith.addf %6, %13 : vector<8x256xf32>
    %cst_11 = arith.constant 5.000000e-01 : f32
    %15 = vector.broadcast %cst_11 : f32 to vector<8x256xf32>
    %16 = arith.mulf %15, %14 : vector<8x256xf32>
    %cst_12 = arith.constant 0.707106769 : f32
    %17 = vector.broadcast %cst_12 : f32 to vector<8x256xf32>
    %18 = arith.mulf %14, %17 : vector<8x256xf32>
    %19 = math.absf %18 : vector<8x256xf32>
    %cst_13 = arith.constant 0.327591091 : f32
    %20 = vector.broadcast %cst_13 : f32 to vector<8x256xf32>
    %21 = arith.mulf %20, %19 : vector<8x256xf32>
    %cst_14 = arith.constant 1.000000e+00 : f32
    %22 = vector.broadcast %cst_14 : f32 to vector<8x256xf32>
    %23 = arith.addf %22, %21 : vector<8x256xf32>
    %24 = tpu.reciprocal %23 {approx = true} : vector<8x256xf32> -> vector<8x256xf32>
    %25 = arith.mulf %23, %24 : vector<8x256xf32>
    %cst_15 = arith.constant 2.000000e+00 : f32
    %26 = vector.broadcast %cst_15 : f32 to vector<8x256xf32>
    %27 = arith.subf %26, %25 : vector<8x256xf32>
    %28 = arith.mulf %24, %27 : vector<8x256xf32>
    %cst_16 = arith.constant 1.06140542 : f32
    %29 = vector.broadcast %cst_16 : f32 to vector<8x256xf32>
    %30 = arith.mulf %28, %29 : vector<8x256xf32>
    %cst_17 = arith.constant -1.45315206 : f32
    %31 = vector.broadcast %cst_17 : f32 to vector<8x256xf32>
    %32 = arith.addf %31, %30 : vector<8x256xf32>
    %33 = arith.mulf %28, %32 : vector<8x256xf32>
    %cst_18 = arith.constant 1.42141378 : f32
    %34 = vector.broadcast %cst_18 : f32 to vector<8x256xf32>
    %35 = arith.addf %34, %33 : vector<8x256xf32>
    %36 = arith.mulf %28, %35 : vector<8x256xf32>
    %cst_19 = arith.constant -0.284496725 : f32
    %37 = vector.broadcast %cst_19 : f32 to vector<8x256xf32>
    %38 = arith.addf %37, %36 : vector<8x256xf32>
    %39 = arith.mulf %28, %38 : vector<8x256xf32>
    %cst_20 = arith.constant 0.254829586 : f32
    %40 = vector.broadcast %cst_20 : f32 to vector<8x256xf32>
    %41 = arith.addf %40, %39 : vector<8x256xf32>
    %42 = arith.mulf %28, %41 : vector<8x256xf32>
    %cst_21 = arith.constant 0.000000e+00 : f32
    %43 = vector.broadcast %cst_21 : f32 to vector<8x256xf32>
    %44 = arith.subf %43, %19 : vector<8x256xf32>
    %45 = arith.mulf %44, %19 : vector<8x256xf32>
    %46 = math.exp %45 : vector<8x256xf32>
    %47 = arith.mulf %42, %46 : vector<8x256xf32>
    %cst_22 = arith.constant 1.000000e+00 : f32
    %48 = vector.broadcast %cst_22 : f32 to vector<8x256xf32>
    %49 = arith.subf %48, %47 : vector<8x256xf32>
    %cst_23 = arith.constant 0.000000e+00 : f32
    %50 = vector.broadcast %cst_23 : f32 to vector<8x256xf32>
    %51 = arith.cmpf olt, %18, %50 : vector<8x256xf32>
    %cst_24 = arith.constant 0.000000e+00 : f32
    %52 = vector.broadcast %cst_24 : f32 to vector<8x256xf32>
    %53 = arith.subf %52, %49 : vector<8x256xf32>
    %54 = arith.select %51, %53, %49 : vector<8x256xi1>, vector<8x256xf32>
    %cst_25 = arith.constant 1.000000e+00 : f32
    %55 = vector.broadcast %cst_25 : f32 to vector<8x256xf32>
    %56 = arith.addf %55, %54 : vector<8x256xf32>
    %57 = arith.mulf %16, %56 : vector<8x256xf32>
    %c0_26 = arith.constant 0 : index
    %c0_27 = arith.constant 0 : index
    %c0_28 = arith.constant 0 : index
    %58 = vector.load %arg7[%c0_26, %c0_27, %c0_28] : memref<1x8x256xf32, #tpu.memory_space<vmem>>, vector<1x8x256xf32>
    %59 = vector.shape_cast %58 : vector<1x8x256xf32> to vector<8x256xf32>
    %60 = vector.shape_cast %57 : vector<8x256xf32> to vector<1x8x256xf32>
    tpu.vector_store %arg7[%c0_26, %c0_27, %c0_28], %60 {strides = array<i32>} : memref<1x8x256xf32, #tpu.memory_space<vmem>>, vector<1x8x256xf32>,
    return
  }
  func.func @transform_0(%arg0: i32, %arg1: i32) -> (i32, i32, i32) {
    %c0_i32 = arith.constant 0 : i32
    %c0_i32_0 = arith.constant 0 : i32
    return %arg0, %c0_i32, %arg1 : i32, i32, i32
  }
  func.func @transform_1(%arg0: i32, %arg1: i32) -> (i32, i32, i32) {
    %c0_i32 = arith.constant 0 : i32
    %c0_i32_0 = arith.constant 0 : i32
    %c0_i32_1 = arith.constant 0 : i32
    return %arg0, %c0_i32, %c0_i32_0 : i32, i32, i32
  }
  func.func @transform_2(%arg0: i32, %arg1: i32) -> (i32, i32) {
    %c0_i32 = arith.constant 0 : i32
    %c0_i32_0 = arith.constant 0 : i32
    %c0_i32_1 = arith.constant 0 : i32
    return %c0_i32, %c0_i32_0 : i32, i32
  }
  func.func @transform_3(%arg0: i32, %arg1: i32) -> (i32, i32) {
    %c0_i32 = arith.constant 0 : i32
    %c0_i32_0 = arith.constant 0 : i32
    %c0_i32_1 = arith.constant 0 : i32
    return %c0_i32, %c0_i32_0 : i32, i32
  }
  func.func @transform_4(%arg0: i32, %arg1: i32) -> (i32, i32) {
    %c0_i32 = arith.constant 0 : i32
    %c0_i32_0 = arith.constant 0 : i32
    %c0_i32_1 = arith.constant 0 : i32
    return %c0_i32, %c0_i32_0 : i32, i32
  }
  func.func @transform_5(%arg0: i32, %arg1: i32) -> (i32, i32, i32) {
    %c0_i32 = arith.constant 0 : i32
    %c0_i32_0 = arith.constant 0 : i32
    return %arg0, %c0_i32, %arg1 : i32, i32, i32
  }
}

</mosaic_0001>

<llo_original>
// kernel: tpu_custom_call.1
$region0: #{tpu_custom_call.1}
  #allocation0 [shape = 'u32[]', space=smem, size = 0x4, offset = 0x4, fixed_abs, tag = 'smem constant byte address 0x4 - core index']
  #allocation1 [shape = 'u32[144,128]{1,0:T(1,128)}', space=vmem, size = 0x12000, scoped, tag = 'internal scratch']
  %s0 = inlined_call_operand.vmem [shape: f32[2,8,256], index: 0, kind: input, shape index: {}]
  %s1 = inlined_call_operand.vmem [shape: f32[2,8,1], index: 1, kind: input, shape index: {}]
  %s2 = inlined_call_operand.vmem [shape: f32[8,8], index: 2, kind: input, shape index: {}]
  %s3 = inlined_call_operand.vmem [shape: f32[8,1], index: 3, kind: input, shape index: {}]
  %s4 = inlined_call_operand.vmem [shape: f32[8,1], index: 4, kind: input, shape index: {}]
  %s5 = inlined_call_operand.hbm [shape: f32[2,8,256], index: 5, kind: output, shape index: {}]
  %s6 = sld [smem:[#allocation0]]
  $region53: #{tpu_custom_call.1} parent=0
    _
  %s8 = ssub.s32 1, %s6
  %s9 = scalar_select 0, %s8, %s6
  $region1: #{tpu_custom_call.1} parent=0
    #allocation2 [shape = 'u8[16384]{0}', space=vmem, size = 0x4000, scoped, tag = 'output window, operand 0']
    #allocation3 [shape = 's32[2]{0}', space=sflag, size = 0x8, scoped, tag = 'scoped memory for tpu_custom_call.1']
    %10 = vsyncpa [#allocation3], 0
    %s11 = scalar_lea.sflag [#allocation3], 1
    %12 = vsyncpa %s11, 0
    loop: start=0, step=1, limit=4
    $region2: #{tpu_custom_call.1} parent=1 // loop_pre_header
      _
    $region3: #{tpu_custom_call.1} parent=1 // loop_header
      %s14 = sphi 0, %s18
      %p15 = scmp.ge.s32.totalorder %s14, 4
      %s21 = sphi 0, %s33
      %s22 = sphi 0, %s29
      %s23 = sphi 0, %s21
      %s24 = sphi 0, %s22
      %s25 = sphi 0, %s23
      %s26 = sphi 0, %s24
      %s38 = sphi 0, %s40
      %s41 = sphi 0, %s38
      %s42 = sphi 0, %s41
      %s58 = sphi 0, %s42
      %s64 = sphi 0, %s66
      %s67 = sphi 0, %s64
      %s68 = sphi 0, %s67
      %s84 = sphi 0, %s68
      %s88 = sphi 0, %s88
      %s90 = sphi 0, %s88
      %s91 = sphi 0, %s90
      %s105 = sphi 0, %s91
      %s109 = sphi 0, %s109
      %s111 = sphi 0, %s109
      %s112 = sphi 0, %s111
      %s126 = sphi 0, %s112
      %s130 = sphi 0, %s130
      %s132 = sphi 0, %s130
      %s133 = sphi 0, %s132
      %s147 = sphi 0, %s133
      %s155 = sphi 0, %s157
      %s158 = sphi 0, %s155
      %s159 = sphi 0, %s158
      %s175 = sphi 0, %s159
    $region4: #{tpu_custom_call.1} parent=1 // loop_header_branch
      %17 = sbr.rel (%p15) target = $region8
    $region5: #{tpu_custom_call.1} parent=1 // loop_body
      %s19 = ssub.s32 %s14, 1
      %s20 = ssub.s32 %s14, 2
      %s27 = sadd.s32 1, %s22
      %p28 = scmp.ge.s32.totalorder %s27, 1
      %s29 = scalar_select %p28, 0, %s27
      %s30 = sadd.s32 1, %s21
      %s31 = scalar_select %p28, %s30, %s21
      %p32 = scmp.ge.s32.totalorder %s31, 2
      %s33 = scalar_select %p32, 0, %s31
      %s34 = ssub.s32 %s21, %s33
      %s35 = ssub.s32 %s22, %s29
      %s36 = sor.u32 %s34, %s35
      %p37 = scmp.eq.s32.totalorder %s36, 0
      %s39 = sadd.s32 %s38, 1
      %s40 = scalar_select %p37, %s38, %s39
      %p43 = pneg %p37
      %p44 = scmp.eq.s32.totalorder %s14, 1
      %p45 = por %p43, %p44
      %p46 = scmp.ne.s32.totalorder %s38, %s41
      %p47 = scmp.eq.s32.totalorder %s14, 0
      %p48 = por %p46, %p47
      %p49 = scmp.ne.s32.totalorder %s38, %s41
      %p50 = scmp.eq.s32.totalorder %s19, 1
      %p51 = por %p49, %p50
      %p52 = scmp.ne.s32.totalorder %s41, %s42
      %p53 = scmp.eq.s32.totalorder %s19, 0
      %p54 = por %p52, %p53
      %p55 = scmp.ne.s32.totalorder %s41, %s42
      %p56 = scmp.eq.s32.totalorder %s20, 1
      %p57 = por %p55, %p56
      %p59 = scmp.ne.s32.totalorder %s42, %s58
      %p60 = scmp.eq.s32.totalorder %s20, 0
      %p61 = por %p59, %p60
      %s62 = ssub.s32 %s21, %s33
      %p63 = scmp.eq.s32.totalorder %s62, 0
      %s65 = sadd.s32 %s64, 1
      %s66 = scalar_select %p63, %s64, %s65
      %p69 = pneg %p63
      %p70 = scmp.eq.s32.totalorder %s14, 1
      %p71 = por %p69, %p70
      %p72 = scmp.ne.s32.totalorder %s64, %s67
      %p73 = scmp.eq.s32.totalorder %s14, 0
      %p74 = por %p72, %p73
      %p75 = scmp.ne.s32.totalorder %s64, %s67
      %p76 = scmp.eq.s32.totalorder %s19, 1
      %p77 = por %p75, %p76
      %p78 = scmp.ne.s32.totalorder %s67, %s68
      %p79 = scmp.eq.s32.totalorder %s19, 0
      %p80 = por %p78, %p79
      %p81 = scmp.ne.s32.totalorder %s67, %s68
      %p82 = scmp.eq.s32.totalorder %s20, 1
      %p83 = por %p81, %p82
      %p85 = scmp.ne.s32.totalorder %s68, %s84
      %p86 = scmp.eq.s32.totalorder %s20, 0
      %p87 = por %p85, %p86
      %s89 = sadd.s32 %s88, 1
      %p92 = scmp.eq.s32.totalorder %s14, 1
      %p93 = scmp.ne.s32.totalorder %s88, %s90
      %p94 = scmp.eq.s32.totalorder %s14, 0
      %p95 = por %p93, %p94
      %p96 = scmp.ne.s32.totalorder %s88, %s90
      %p97 = scmp.eq.s32.totalorder %s19, 1
      %p98 = por %p96, %p97
      %p99 = scmp.ne.s32.totalorder %s90, %s91
      %p100 = scmp.eq.s32.totalorder %s19, 0
      %p101 = por %p99, %p100
      %p102 = scmp.ne.s32.totalorder %s90, %s91
      %p103 = scmp.eq.s32.totalorder %s20, 1
      %p104 = por %p102, %p103
      %p106 = scmp.ne.s32.totalorder %s91, %s105
      %p107 = scmp.eq.s32.totalorder %s20, 0
      %p108 = por %p106, %p107
      %s110 = sadd.s32 %s109, 1
      %p113 = scmp.eq.s32.totalorder %s14, 1
      %p114 = scmp.ne.s32.totalorder %s109, %s111
      %p115 = scmp.eq.s32.totalorder %s14, 0
      %p116 = por %p114, %p115
      %p117 = scmp.ne.s32.totalorder %s109, %s111
      %p118 = scmp.eq.s32.totalorder %s19, 1
      %p119 = por %p117, %p118
      %p120 = scmp.ne.s32.totalorder %s111, %s112
      %p121 = scmp.eq.s32.totalorder %s19, 0
      %p122 = por %p120, %p121
      %p123 = scmp.ne.s32.totalorder %s111, %s112
      %p124 = scmp.eq.s32.totalorder %s20, 1
      %p125 = por %p123, %p124
      %p127 = scmp.ne.s32.totalorder %s112, %s126
      %p128 = scmp.eq.s32.totalorder %s20, 0
      %p129 = por %p127, %p128
      %s131 = sadd.s32 %s130, 1
      %p134 = scmp.eq.s32.totalorder %s14, 1
      %p135 = scmp.ne.s32.totalorder %s130, %s132
      %p136 = scmp.eq.s32.totalorder %s14, 0
      %p137 = por %p135, %p136
      %p138 = scmp.ne.s32.totalorder %s130, %s132
      %p139 = scmp.eq.s32.totalorder %s19, 1
      %p140 = por %p138, %p139
      %p141 = scmp.ne.s32.totalorder %s132, %s133
      %p142 = scmp.eq.s32.totalorder %s19, 0
      %p143 = por %p141, %p142
      %p144 = scmp.ne.s32.totalorder %s132, %s133
      %p145 = scmp.eq.s32.totalorder %s20, 1
      %p146 = por %p144, %p145
      %p148 = scmp.ne.s32.totalorder %s133, %s147
      %p149 = scmp.eq.s32.totalorder %s20, 0
      %p150 = por %p148, %p149
      %s151 = ssub.s32 %s21, %s33
      %s152 = ssub.s32 %s22, %s29
      %s153 = sor.u32 %s151, %s152
      %p154 = scmp.eq.s32.totalorder %s153, 0
      %s156 = sadd.s32 %s155, 1
      %s157 = scalar_select %p154, %s155, %s156
      %p160 = pneg %p154
      %p161 = scmp.eq.s32.totalorder %s14, 1
      %p162 = por %p160, %p161
      %p163 = scmp.ne.s32.totalorder %s155, %s158
      %p164 = scmp.eq.s32.totalorder %s14, 0
      %p165 = por %p163, %p164
      %p166 = scmp.ne.s32.totalorder %s155, %s158
      %p167 = scmp.eq.s32.totalorder %s19, 1
      %p168 = por %p166, %p167
      %p169 = scmp.ne.s32.totalorder %s158, %s159
      %p170 = scmp.eq.s32.totalorder %s19, 0
      %p171 = por %p169, %p170
      %p172 = scmp.ne.s32.totalorder %s158, %s159
      %p173 = scmp.eq.s32.totalorder %s20, 1
      %p174 = por %p172, %p173
      %p176 = scmp.ne.s32.totalorder %s159, %s175
      %p177 = scmp.eq.s32.totalorder %s20, 0
      %p178 = por %p176, %p177
      %p179 = scmp.le.s32.totalorder 1, %s14
      %p180 = scmp.lt.s32.totalorder %s14, 3
      %p181 = pnand %p179, %p180
      %p182 = pneg %p181
      // Predicated region
      $region9: #{tpu_custom_call.1} parent=5 // pred_check
        _
      $region10: #{tpu_custom_call.1} parent=5 // pred_check_branch
        %184 = sbr.rel (%p181) target = $region12
      $region11: #{tpu_custom_call.1} parent=5 // pred_region
        %s185 = ssub.s32 %s14, 1
        // Predicated region
        $region13: #{tpu_custom_call.1} parent=11 // pred_check
          %p186 = pneg %p101
        $region14: #{tpu_custom_call.1} parent=11 // pred_check_branch
          %188 = sbr.rel (%p186) target = $region16
        $region15: #{tpu_custom_call.1} parent=11 // pred_region
          _
        $region16: #{tpu_custom_call.1} parent=11 // pred_fallthru
          _
        // Predicated region
        $region17: #{tpu_custom_call.1} parent=11 // pred_check
          %p189 = pneg %p122
        $region18: #{tpu_custom_call.1} parent=11 // pred_check_branch
          %191 = sbr.rel (%p189) target = $region20
        $region19: #{tpu_custom_call.1} parent=11 // pred_region
          _
        $region20: #{tpu_custom_call.1} parent=11 // pred_fallthru
          _
        // Predicated region
        $region21: #{tpu_custom_call.1} parent=11 // pred_check
          %p192 = pneg %p143
        $region22: #{tpu_custom_call.1} parent=11 // pred_check_branch
          %194 = sbr.rel (%p192) target = $region24
        $region23: #{tpu_custom_call.1} parent=11 // pred_region
          _
        $region24: #{tpu_custom_call.1} parent=11 // pred_fallthru
          _
      $region12: #{tpu_custom_call.1} parent=5 // pred_fallthru
        _
      %p195 = scmp.lt.s32.totalorder %s14, 2
      // Predicated region
      $region25: #{tpu_custom_call.1} parent=5 // pred_check
        %p196 = pneg %p195
      $region26: #{tpu_custom_call.1} parent=5 // pred_check_branch
        %198 = sbr.rel (%p196) target = $region28
      $region27: #{tpu_custom_call.1} parent=5 // pred_region
        // Predicated region
        $region29: #{tpu_custom_call.1} parent=27 // pred_check
          %p199 = pneg %p48
        $region30: #{tpu_custom_call.1} parent=27 // pred_check_branch
          %201 = sbr.rel (%p199) target = $region32
        $region31: #{tpu_custom_call.1} parent=27 // pred_region
          %s202 = smul.u32 2, %s22
          %p203 = scmp.lt.s32.totalorder %s21, 1
          %s204 = scalar_select %p203, %s21, 1
          %p205 = scmp.lt.s32.totalorder %s202, 1
          %s206 = scalar_select %p205, %s202, 1
          %s207 = smul.addr %s204, 2
          %s208 = sadd.s32 %s206, %s207
          %s209 = smul.addr %s208, 8
          %s210 = scalar_lea.vmem %s0, %s209
          %s211 = smul.u32 2, %s22
        $region32: #{tpu_custom_call.1} parent=27 // pred_fallthru
          _
        // Predicated region
        $region33: #{tpu_custom_call.1} parent=27 // pred_check
          %p212 = pneg %p74
        $region34: #{tpu_custom_call.1} parent=27 // pred_check_branch
          %214 = sbr.rel (%p212) target = $region36
        $region35: #{tpu_custom_call.1} parent=27 // pred_region
          %p215 = scmp.lt.s32.totalorder %s21, 1
          %s216 = scalar_select %p215, %s21, 1
          %s217 = smul.addr %s216, 8
          %s218 = scalar_lea.vmem %s1, %s217
        $region36: #{tpu_custom_call.1} parent=27 // pred_fallthru
          _
      $region28: #{tpu_custom_call.1} parent=5 // pred_fallthru
        _
      %p219 = scmp.le.s32.totalorder 1, %s14
      %p220 = scmp.lt.s32.totalorder %s14, 3
      %p221 = pnand %p219, %p220
      %p222 = pneg %p221
      // Predicated region
      $region37: #{tpu_custom_call.1} parent=5 // pred_check
        _
      $region38: #{tpu_custom_call.1} parent=5 // pred_check_branch
        %224 = sbr.rel (%p221) target = $region40
      $region39: #{tpu_custom_call.1} parent=5 // pred_region
        %s225 = ssub.s32 %s14, 1
        %s226 = smul.u32 2, %s24
        %p227 = scmp.lt.s32.totalorder %s23, 1
        %s228 = scalar_select %p227, %s23, 1
        %p229 = scmp.lt.s32.totalorder %s226, 1
        %s230 = scalar_select %p229, %s226, 1
        %s231 = smul.addr %s228, 2
        %s232 = sadd.s32 %s230, %s231
        %s233 = smul.addr %s232, 8
        %s234 = scalar_lea.vmem %s0, %s233
        %p235 = pneg %p54
        %p236 = pneg %p51
        %p237 = scmp.lt.s32.totalorder %s23, 1
        %s238 = scalar_select %p237, %s23, 1
        %s239 = smul.addr %s238, 8
        %s240 = scalar_lea.vmem %s1, %s239
        %p241 = pneg %p80
        %p242 = pneg %p77
        %p243 = pneg %p101
        %p244 = pneg %p98
        %p245 = pneg %p122
        %p246 = pneg %p119
        %p247 = pneg %p143
        %p248 = pneg %p140
        %p249 = pneg %p171
        %p250 = pneg %p168
        %s251 = sand.u32 %s158, 1
        %s252 = scalar_lea.sflag [#allocation3], %s251
        %s253 = sand.u32 %s158, 1
        %s254 = smul.addr %s253, 16
        %s255 = scalar_lea.vmem [#allocation2], %s254
        %s256 = smul.u32 2, %s24
        %p257 = scmp.lt.s32.totalorder %s23, 1
        %s258 = scalar_select %p257, %s23, 1
        %p259 = scmp.lt.s32.totalorder %s256, 1
        %s260 = scalar_select %p259, %s256, 1
        %s261 = smul.addr %s258, 2
        %s262 = sadd.s32 %s260, %s261
        %s263 = smul.addr %s262, 8
        %s264 = scalar_lea.vmem %s0, %s263
        %s265 = smul.u32 2, %s24
        %p266 = scmp.lt.s32.totalorder %s23, 1
        %s267 = scalar_select %p266, %s23, 1
        %s268 = smul.addr %s267, 8
        %s269 = scalar_lea.vmem %s1, %s268
        %s270 = smul.u32 2, %s24
        %v271 = vld [vmem:[%s264] sm:$0xff]
        %v272 = vld [vmem:[%s264 + $0x8] sm:$0xff]
        %v273 = vld [vmem:[%s2] sm:$0xff]
        %v274 = vld [vmem:[%s3] sm:$0xff]
        %276 = vset.pattern.permute.xlu0 0
        %277 = vperm.xlu0 %276, %v274
        %v278 = vpop.permute.xlu0 %277
        %vm280 = vcmask 64512
        %v282 = vsel %vm280, %v273, 0
        %284 = vmatprep.subr.mxu0 %v272
        %285 = vmatpush1.msra.mxu0 %v271
        %286 = vmatprep.subr.mxu0 0.0
        %287 = vmatpush1.msra.mxu0 0.0
        %288 = vmatprep.subr.mxu0 0.0
        %289 = vmatpush1.msra.mxu0 0.0
        %290 = vmatprep.subr.mxu0 0.0
        %291 = vmatpush1.msra.mxu0 0.0
        %292 = vmatprep.subr.mxu0 0.0
        %293 = vmatpush1.msra.mxu0 0.0
        %294 = vmatprep.subr.mxu0 0.0
        %295 = vmatpush1.msra.mxu0 0.0
        %296 = vmatprep.subr.mxu0 0.0
        %297 = vmatpush1.msra.mxu0 0.0
        %298 = vmatprep.subr.mxu0 0.0
        %299 = vmatpush1.msra.mxu0 0.0
        %300 = vmatprep.subr.mxu0 0.0
        %301 = vmatpush1.msra.mxu0 0.0
        %302 = vmatprep.subr.mxu0 0.0
        %303 = vmatpush1.msra.mxu0 0.0
        %304 = vmatprep.subr.mxu0 0.0
        %305 = vmatpush1.msra.mxu0 0.0
        %306 = vmatprep.subr.mxu0 0.0
        %307 = vmatpush1.msra.mxu0 0.0
        %308 = vmatprep.subr.mxu0 0.0
        %309 = vmatpush1.msra.mxu0 0.0
        %310 = vmatprep.subr.mxu0 0.0
        %311 = vmatpush1.msra.mxu0 0.0
        %312 = vmatprep.subr.mxu0 0.0
        %313 = vmatpush1.msra.mxu0 0.0
        %314 = vmatprep.subr.mxu0 0.0
        %315 = vmatpush1.msra.mxu0 0.0
        %316 = vmatprep.subr.mxu0 0.0
        %317 = vmatpush1.msra.mxu0 0.0
        %318 = vmatprep.subr.mxu0 0.0
        %319 = vmatpush1.msra.mxu0 0.0
        %320 = vmatprep.subr.mxu0 0.0
        %321 = vmatpush1.msra.mxu0 0.0
        %322 = vmatprep.subr.mxu0 0.0
        %323 = vmatpush1.msra.mxu0 0.0
        %324 = vmatprep.subr.mxu0 0.0
        %325 = vmatpush1.msra.mxu0 0.0
        %326 = vmatprep.subr.mxu0 0.0
        %327 = vmatpush1.msra.mxu0 0.0
        %328 = vmatprep.subr.mxu0 0.0
        %329 = vmatpush1.msra.mxu0 0.0
        %330 = vmatprep.subr.mxu0 0.0
        %331 = vmatpush1.msra.mxu0 0.0
        %332 = vmatprep.subr.mxu0 0.0
        %333 = vmatpush1.msra.mxu0 0.0
        %334 = vmatprep.subr.mxu0 0.0
        %335 = vmatpush1.msra.mxu0 0.0
        %336 = vmatprep.subr.mxu0 0.0
        %337 = vmatpush1.msra.mxu0 0.0
        %338 = vmatprep.subr.mxu0 0.0
        %339 = vmatpush1.msra.mxu0 0.0
        %340 = vmatprep.subr.mxu0 0.0
        %341 = vmatpush1.msra.mxu0 0.0
        %342 = vmatprep.subr.mxu0 0.0
        %343 = vmatpush1.msra.mxu0 0.0
        %344 = vmatprep.subr.mxu0 0.0
        %345 = vmatpush1.msra.mxu0 0.0
        %346 = vmatprep.subr.mxu0 0.0
        %347 = vmatpush1.msra.mxu0 0.0
        %348 = vmatprep.mubr.f32.mxu0 0.0
        %349 = vmatmul.mubr.f32.gmra.mrb[0].mxu0 %v282
        %v350 = vpop.f32.mrb[0].mxu0
        %v351 = vadd.f32 %v278, %v350
        %v352 = vpop.f32.mrb[0].mxu0
        %v353 = vadd.f32 %v278, %v352
        %354 = vdwg.mxu0
        %v355 = vld [vmem:[%s4] sm:$0xff]
        %v356 = vld [vmem:[%s269] sm:$0xff]
        %358 = vset.pattern.permute.xlu0 0
        %359 = vperm.xlu0 %358, %v356
        %v360 = vpop.permute.xlu0 %359
        %v362 = vsub.f32 %v351, %v360
        %v363 = vsub.f32 %v353, %v360
        %365 = vset.pattern.permute.xlu0 0
        %366 = vperm.xlu0 %365, %v355
        %v367 = vpop.permute.xlu0 %366
        %v369 = vmul.f32 %v367, %v362
        %v370 = vmul.f32 %v367, %v363
        %v371 = vadd.f32 %v351, %v369
        %v372 = vadd.f32 %v353, %v370
        %v373 = vmul.f32 %v371, 0.5
        %v374 = vmul.f32 %v372, 0.5
        %v375 = vmul.f32 %v371, 0.70710677
        %v376 = vmul.f32 %v372, 0.70710677
        %v377 = vand.u32 2147483647, %v375
        %v378 = vand.u32 2147483647, %v376
        %v379 = vmul.f32 %v377, 0.3275911
        %v380 = vmul.f32 %v378, 0.3275911
        %v381 = vadd.f32 %v379, 1.0
        %v382 = vadd.f32 %v380, 1.0
        %v383 = vrcp.pop %v381
        %v384 = vrcp.pop %v382
        %v385 = vmul.f32 %v381, %v383
        %v386 = vmul.f32 %v382, %v384
        %v387 = vsub.f32 2.0, %v385
        %v388 = vsub.f32 2.0, %v386
        %v389 = vmul.f32 %v383, %v387
        %v390 = vmul.f32 %v384, %v388
        %v391 = vmul.f32 %v389, 1.0614054
        %v392 = vmul.f32 %v390, 1.0614054
        %v393 = vadd.f32 %v391, -1.4531521
        %v394 = vadd.f32 %v392, -1.4531521
        %v395 = vmul.f32 %v389, %v393
        %v396 = vmul.f32 %v390, %v394
        %v397 = vadd.f32 %v395, 1.4214138
        %v398 = vadd.f32 %v396, 1.4214138
        %v399 = vmul.f32 %v389, %v397
        %v400 = vmul.f32 %v390, %v398
        %v401 = vadd.f32 %v399, -0.28449672
        %v402 = vadd.f32 %v400, -0.28449672
        %v403 = vmul.f32 %v389, %v401
        %v404 = vmul.f32 %v390, %v402
        %v405 = vadd.f32 %v403, 0.2548296
        %v406 = vadd.f32 %v404, 0.2548296
        %v407 = vmul.f32 %v389, %v405
        %v408 = vmul.f32 %v390, %v406
        %v409 = vsub.f32 0.0, %v377
        %v410 = vsub.f32 0.0, %v378
        %v411 = vmul.f32 %v409, %v377
        %v412 = vmul.f32 %v410, %v378
        %v413 = vmul.f32 %v411, 1.442695
        %v414 = vpow.pop %v413
        %v415 = vmul.f32 %v412, 1.442695
        %v416 = vpow.pop %v415
        %v417 = vmul.f32 %v407, %v414
        %v418 = vmul.f32 %v408, %v416
        %v419 = vsub.f32 1.0, %v417
        %v420 = vsub.f32 1.0, %v418
        %vm421 = vcmp.lt.f32.partialorder %v375, 0.0
        %vm422 = vcmp.lt.f32.partialorder %v376, 0.0
        %v423 = vsub.f32 0.0, %v419
        %v424 = vsub.f32 0.0, %v420
        %v425 = vsel %vm421, %v423, %v419
        %v426 = vsel %vm422, %v424, %v420
        %v427 = vadd.f32 %v425, 1.0
        %v428 = vadd.f32 %v426, 1.0
        %v429 = vmul.f32 %v373, %v427
        %v430 = vmul.f32 %v374, %v428
        %431 = vst [vmem:[%s255] sm:$0xff] %v429
        %432 = vst [vmem:[%s255 + $0x8] sm:$0xff] %v430
        %s433 = sand.u32 %s158, 1
        %s434 = scalar_lea.sflag [#allocation3], %s433
        %s435 = sand.u32 %s158, 1
        %s436 = smul.addr %s435, 16
        %s437 = scalar_lea.vmem [#allocation2], %s436
        // Predicated region
        $region41: #{tpu_custom_call.1} parent=39 // pred_check
          %p438 = pneg %p168
        $region42: #{tpu_custom_call.1} parent=39 // pred_check_branch
          %440 = sbr.rel (%p438) target = $region44
        $region43: #{tpu_custom_call.1} parent=39 // pred_region
          %s441 = smul.u32 2, %s24
          %s443 = ssub.s32 256, 256
          %444 = vsyncadd %s434, %s443
          %s445 = smul.addr %s23, 2
          %s446 = sadd.s32 %s441, %s445
          %s447 = smul.addr %s446, 128
          %s448 = scalar_lea.hbm %s5, %s447
          %s450 = sshll.u32 %s437, 4
          %s451 = int_to_ptr.vmem [resolvable:$true] %s450
          %453 = dma.vmem_to_hbm [thread:$0]  %s451, 256, %s448, %s434
        $region44: #{tpu_custom_call.1} parent=39 // pred_fallthru
          _
      $region40: #{tpu_custom_call.1} parent=5 // pred_fallthru
        _
      %p454 = scmp.le.s32.totalorder 2, %s14
      // Predicated region
      $region45: #{tpu_custom_call.1} parent=5 // pred_check
        %p455 = pneg %p454
      $region46: #{tpu_custom_call.1} parent=5 // pred_check_branch
        %457 = sbr.rel (%p455) target = $region48
      $region47: #{tpu_custom_call.1} parent=5 // pred_region
        %s458 = ssub.s32 %s14, 2
        // Predicated region
        $region49: #{tpu_custom_call.1} parent=47 // pred_check
          %p459 = pneg %p174
        $region50: #{tpu_custom_call.1} parent=47 // pred_check_branch
          %461 = sbr.rel (%p459) target = $region52
        $region51: #{tpu_custom_call.1} parent=47 // pred_region
          %s462 = sand.u32 %s159, 1
          %s463 = scalar_lea.sflag [#allocation3], %s462
          %s464 = sand.u32 %s159, 1
          %s465 = smul.addr %s464, 16
          %s466 = scalar_lea.vmem [#allocation2], %s465
          %467 = dma.done %s463, 256
        $region52: #{tpu_custom_call.1} parent=47 // pred_fallthru
          _
      $region48: #{tpu_custom_call.1} parent=5 // pred_fallthru
        _
    $region6: #{tpu_custom_call.1} parent=1 // loop_footer
      %s18 = sadd.s32 1, %s14
    $region7: #{tpu_custom_call.1} parent=1 // loop_footer_branch
      %13 = sbr.rel target = $region3
    $region8: #{tpu_custom_call.1} parent=1 // loop_exit
      _
    %468 = vsyncpa [#allocation3], 1
    %s469 = scalar_lea.sflag [#allocation3], 1
    %470 = vsyncpa %s469, 1

</llo_original>
